<compile_context>
chip_gen: v6e
topology: v6e:2x2x1
jax: 0.10.0
libtpu: 0.0.40
codegen_flags: <defaults>
</compile_context>

<pallas_src>
import functools

import jax
import jax.numpy as jnp
from jax.experimental import pallas as pl
from jax.experimental.pallas import tpu as pltpu


def _round_up(n: int, m: int) -> int:
    return ((n + m - 1) // m) * m


def phoneme_decoder_kernel(
    x_ref,      # (TM, Hp)  bf16
    w1_ref,     # (Hp, Ip)  bf16   intermediate
    b1_ref,     # (1, Ip)   f32
    w2_ref,     # (Ip, Hp)  bf16   dense
    b2_ref,     # (1, Hp)   f32
    g_ref,      # (1, Hp)   f32    LayerNorm gamma (zero-padded)
    beta_ref,   # (1, Hp)   f32    LayerNorm beta  (zero-padded)
    wf_ref,     # (Hp, Fp)  bf16   feat_head
    bf_ref,     # (1, Fp)   f32
    wif_ref,    # (Hp, Op)  bf16   fused ipa weight = Wf @ Wi
    bif_ref,    # (1, Op)   f32    fused ipa bias   = bf @ Wi + bi
    feat_ref,   # (TM, Fp)  f32 out
    ipa_ref,    # (TM, Op)  f32 out
    *,
    true_h: int,
):
    x = x_ref[...]  # bf16

    # intermediate = ReLU(x @ W1 + b1), f32 accumulation on the MXU.
    inter = jnp.dot(x, w1_ref[...], preferred_element_type=jnp.float32) + b1_ref[...]
    inter = jnp.maximum(inter, 0.0)

    # hidden_states = dense(intermediate)
    hidden = jnp.dot(inter.astype(jnp.bfloat16), w2_ref[...],
                     preferred_element_type=jnp.float32) + b2_ref[...]
    # TODO(synk): nn.Dropout is identity at inference; training-mode dropout not implemented.

    # LayerNorm(hidden + x), eps = 1e-5 (PyTorch default).
    # Padded lanes of h are exactly zero, so single-pass sums over the padded
    # width divided by the TRUE hidden dim give the correct mean / E[h^2].
    h = hidden + x.astype(jnp.float32)
    inv_h = 1.0 / float(true_h)
    mean = jnp.sum(h, axis=-1, keepdims=True) * inv_h
    mean_sq = jnp.sum(h * h, axis=-1, keepdims=True) * inv_h
    var = mean_sq - mean * mean
    h_ln = (h - mean) * jax.lax.rsqrt(var + 1e-5) * g_ref[...] + beta_ref[...]
    h_ln_bf = h_ln.astype(jnp.bfloat16)  # padded lanes are 0 (gamma/beta padded with 0)

    # feat head and fused ipa head: two independent K = H matmuls.
    feat = jnp.dot(h_ln_bf, wf_ref[...], preferred_element_type=jnp.float32) + bf_ref[...]
    ipa = jnp.dot(h_ln_bf, wif_ref[...], preferred_element_type=jnp.float32) + bif_ref[...]

    feat_ref[...] = feat.astype(feat_ref.dtype)
    ipa_ref[...] = ipa.astype(ipa_ref.dtype)


def phoneme_decoder_forward(x, params, *, tm=256):
    """x: [B, S, H] float32. Returns (feat_logits [B,S,F], ipa_logits [B,S,O])."""
    B, S, H = x.shape
    w1, b1, w2, b2, g, beta, wf, bf, wi, bi = params
    I = w1.shape[1]
    F = wf.shape[1]
    O = wi.shape[1]

    # Lane-dense (128-padded) feature dims; 8-aligned row tile.
    Hp = _round_up(H, 128)
    Ip = _round_up(I, 128)
    Fp = _round_up(F, 128)
    Op = _round_up(O, 128)

    M = B * S
    # For realistic M, tm=256 amortizes per-grid-step overhead and keeps the
    # grid >= 2 iterations (so v7x's second TensorCore gets work); for tiny M
    # we shrink the tile instead of padding rows excessively.
    tm = min(tm, _round_up(M, 8))
    Mp = _round_up(M, tm)

    def pad2(a, r, c):
        return jnp.pad(a, ((0, r - a.shape[0]), (0, c - a.shape[1])))

    # Zero-padded parameters; MXU operands bf16, biases / LN params f32.
    w1p = pad2(w1, Hp, Ip).astype(jnp.bfloat16)
    b1p = pad2(b1, 1, Ip)
    w2p = pad2(w2, Ip, Hp).astype(jnp.bfloat16)
    b2p = pad2(b2, 1, Hp)
    gp = pad2(g, 1, Hp)
    betap = pad2(beta, 1, Hp)
    wfp = pad2(wf, Hp, Fp).astype(jnp.bfloat16)
    bfp = pad2(bf, 1, Fp)
    # Fused ipa head (algebraically exact in f32; cast to bf16 for the MXU).
    wif = pad2(wf @ wi, Hp, Op).astype(jnp.bfloat16)
    bif = pad2(bf @ wi + bi, 1, Op)

    x2 = pad2(x.reshape(M, H), Mp, Hp).astype(jnp.bfloat16)

    def rowspec(cols):
        return pl.BlockSpec((tm, cols), lambda i: (i, 0))

    def fullspec(shape):
        # Constant index_map: weight blocks are fetched once and stay resident.
        # (If profiling shows them double-buffered, pl.Buffered(1) would reclaim
        #  the extra copy; left at default to keep lowering conservative.)
        return pl.BlockSpec(shape, lambda i: (0,) * len(shape))

    kernel = functools.partial(phoneme_decoder_kernel, true_h=H)

    feat, ipa = pl.pallas_call(
        kernel,
        out_shape=(
            jax.ShapeDtypeStruct((Mp, Fp), jnp.float32),
            jax.ShapeDtypeStruct((Mp, Op), jnp.float32),
        ),
        grid_spec=pltpu.PrefetchScalarGridSpec(
            num_scalar_prefetch=0,
            grid=(Mp // tm,),
            in_specs=[
                rowspec(Hp),            # x
                fullspec((Hp, Ip)),     # w1
                fullspec((1, Ip)),      # b1
                fullspec((Ip, Hp)),     # w2
                fullspec((1, Hp)),      # b2
                fullspec((1, Hp)),      # gamma
                fullspec((1, Hp)),      # beta
                fullspec((Hp, Fp)),     # wf
                fullspec((1, Fp)),      # bf
                fullspec((Hp, Op)),     # wi_fused
                fullspec((1, Op)),      # bi_fused
            ],
            out_specs=[rowspec(Fp), rowspec(Op)],
        ),
        compiler_params=pltpu.CompilerParams(
            dimension_semantics=("parallel",),
            # Above the 16 MiB (v5e) / 32 MiB (v6e, v7x) scoped defaults,
            # within v7x's 64 MiB physical VMEM.
            vmem_limit_bytes=48 * 1024 * 1024,
        ),
    )(x2, w1p, b1p, w2p, b2p, gp, betap, wfp, bfp, wif, bif)

    feat = feat[:M, :F].reshape(B, S, F)
    ipa = ipa[:M, :O].reshape(B, S, O)
    return feat, ipa


def init_params(key, hidden_dim, feat_dim, output_dim):
    """Deterministic synthetic parameters (matching shapes of the PyTorch module)."""
    intermediate_dim = hidden_dim * 2
    ks = jax.random.split(key, 8)

    def lin(k, din, dout):
        kw, kb = jax.random.split(k)
        scale = 1.0 / jnp.sqrt(din)
        w = jax.random.uniform(kw, (din, dout), jnp.float32, -scale, scale)
        b = jax.random.uniform(kb, (1, dout), jnp.float32, -scale, scale)
        return w, b

    w1, b1 = lin(ks[0], hidden_dim, intermediate_dim)       # intermediate
    w2, b2 = lin(ks[1], intermediate_dim, hidden_dim)       # dense
    gamma = jnp.ones((1, hidden_dim), jnp.float32)          # LayerNorm weight
    beta = jnp.zeros((1, hidden_dim), jnp.float32)          # LayerNorm bias
    wf, bf = lin(ks[2], hidden_dim, feat_dim)                # feat_head
    wi, bi = lin(ks[3], feat_dim, output_dim)                # ipa_head
    return (w1, b1, w2, b2, gamma, beta, wf, bf, wi, bi)


def reference_forward(x, params):
    """Plain-JAX f32 reference of the PyTorch forward (eval mode)."""
    w1, b1, w2, b2, g, beta, wf, bf, wi, bi = params
    inter = jax.nn.relu(x @ w1 + b1)
    hidden = inter @ w2 + b2
    h = hidden + x
    mean = jnp.mean(h, axis=-1, keepdims=True)
    var = jnp.mean((h - mean) ** 2, axis=-1, keepdims=True)
    xln = (h - mean) * jax.lax.rsqrt(var + 1e-5) * g + beta
    feat = xln @ wf + bf
    ipa = feat @ wi + bi
    return feat, ipa


if __name__ == "__main__":
    B, S = 2, 8
    hidden_dim, feat_dim, output_dim = 32, 16, 48

    key = jax.random.PRNGKey(0)
    kx, kp = jax.random.split(key)
    x = jax.random.normal(kx, (B, S, hidden_dim), jnp.float32)
    params = init_params(kp, hidden_dim, feat_dim, output_dim)

    feat_logits, ipa_logits = phoneme_decoder_forward(x, params, tm=256)
    feat_logits = jax.block_until_ready(feat_logits)
    ipa_logits = jax.block_until_ready(ipa_logits)

    # Sanity-check against the pure-JAX f32 reference. bf16 MXU inputs + the
    # fused ipa head introduce bf16-level deviations, so tolerances are widened.
    feat_ref, ipa_ref = reference_forward(x, params)
    assert feat_logits.shape == (B, S, feat_dim)
    assert ipa_logits.shape == (B, S, output_dim)
    assert jnp.allclose(feat_logits, feat_ref, atol=5e-2, rtol=5e-2)
    assert jnp.allclose(ipa_logits, ipa_ref, atol=5e-2, rtol=5e-2)

    print("KERNEL_OK")
</pallas_src>

<mosaic_0001>
module attributes {stable_mosaic.version = 11 : i64} {
  func.func @phoneme_decoder_kernel(%arg0: i32, %arg1: memref<16x128xbf16, #tpu.memory_space<vmem>>, %arg2: memref<128x128xbf16, #tpu.memory_space<vmem>>, %arg3: memref<1x128xf32, #tpu.memory_space<vmem>>, %arg4: memref<128x128xbf16, #tpu.memory_space<vmem>>, %arg5: memref<1x128xf32, #tpu.memory_space<vmem>>, %arg6: memref<1x128xf32, #tpu.memory_space<vmem>>, %arg7: memref<1x128xf32, #tpu.memory_space<vmem>>, %arg8: memref<128x128xbf16, #tpu.memory_space<vmem>>, %arg9: memref<1x128xf32, #tpu.memory_space<vmem>>, %arg10: memref<128x128xbf16, #tpu.memory_space<vmem>>, %arg11: memref<1x128xf32, #tpu.memory_space<vmem>>, %arg12: memref<16x128xf32, #tpu.memory_space<vmem>>, %arg13: memref<16x128xf32, #tpu.memory_space<vmem>>) attributes {dimension_semantics = [#tpu.dimension_semantics<parallel>], iteration_bounds = array<i64: 1>, scalar_prefetch = 0 : i64, scratch_operands = 0 : i64, tpu.core_type = #tpu.core_type<tc>, window_params = [{transform_indices = @transform_0, window_bounds = array<i64: 16, 128>}, {pipeline_mode = #tpu.pipeline_mode<synchronous>, transform_indices = @transform_1, window_bounds = array<i64: 128, 128>}, {pipeline_mode = #tpu.pipeline_mode<synchronous>, transform_indices = @transform_2, window_bounds = array<i64: 1, 128>}, {pipeline_mode = #tpu.pipeline_mode<synchronous>, transform_indices = @transform_3, window_bounds = array<i64: 128, 128>}, {pipeline_mode = #tpu.pipeline_mode<synchronous>, transform_indices = @transform_4, window_bounds = array<i64: 1, 128>}, {pipeline_mode = #tpu.pipeline_mode<synchronous>, transform_indices = @transform_5, window_bounds = array<i64: 1, 128>}, {pipeline_mode = #tpu.pipeline_mode<synchronous>, transform_indices = @transform_6, window_bounds = array<i64: 1, 128>}, {pipeline_mode = #tpu.pipeline_mode<synchronous>, transform_indices = @transform_7, window_bounds = array<i64: 128, 128>}, {pipeline_mode = #tpu.pipeline_mode<synchronous>, transform_indices = @transform_8, window_bounds = array<i64: 1, 128>}, {pipeline_mode = #tpu.pipeline_mode<synchronous>, transform_indices = @transform_9, window_bounds = array<i64: 128, 128>}, {pipeline_mode = #tpu.pipeline_mode<synchronous>, transform_indices = @transform_10, window_bounds = array<i64: 1, 128>}, {transform_indices = @transform_11, window_bounds = array<i64: 16, 128>}, {transform_indices = @transform_12, window_bounds = array<i64: 16, 128>}]} {
    %c0 = arith.constant 0 : index
    %c0_0 = arith.constant 0 : index
    %0 = vector.load %arg1[%c0, %c0_0] : memref<16x128xbf16, #tpu.memory_space<vmem>>, vector<16x128xbf16>
    %c0_1 = arith.constant 0 : index
    %c0_2 = arith.constant 0 : index
    %1 = vector.load %arg2[%c0_1, %c0_2] : memref<128x128xbf16, #tpu.memory_space<vmem>>, vector<128x128xbf16>
    %cst = arith.constant dense<0.000000e+00> : vector<16x128xf32>
    %2 = tpu.matmul %0, %1, %cst {dimension_numbers = #tpu.dot_dimension_numbers<[1], [0], [0], [1], [0, 0, 1, 1], [], []>} : vector<16x128xbf16>, vector<128x128xbf16>, vector<16x128xf32> -> vector<16x128xf32>
    %c0_3 = arith.constant 0 : index
    %c0_4 = arith.constant 0 : index
    %3 = vector.load %arg3[%c0_3, %c0_4] : memref<1x128xf32, #tpu.memory_space<vmem>>, vector<1x128xf32>
    %4 = vector.broadcast %3 : vector<1x128xf32> to vector<16x128xf32>
    %5 = arith.addf %2, %4 : vector<16x128xf32>
    %cst_5 = arith.constant 0.000000e+00 : f32
    %6 = vector.broadcast %cst_5 : f32 to vector<16x128xf32>
    %7 = arith.maximumf %5, %6 : vector<16x128xf32>
    %8 = arith.truncf %7 : vector<16x128xf32> to vector<16x128xbf16>
    %c0_6 = arith.constant 0 : index
    %c0_7 = arith.constant 0 : index
    %9 = vector.load %arg4[%c0_6, %c0_7] : memref<128x128xbf16, #tpu.memory_space<vmem>>, vector<128x128xbf16>
    %cst_8 = arith.constant dense<0.000000e+00> : vector<16x128xf32>
    %10 = tpu.matmul %8, %9, %cst_8 {dimension_numbers = #tpu.dot_dimension_numbers<[1], [0], [0], [1], [0, 0, 1, 1], [], []>} : vector<16x128xbf16>, vector<128x128xbf16>, vector<16x128xf32> -> vector<16x128xf32>
    %c0_9 = arith.constant 0 : index
    %c0_10 = arith.constant 0 : index
    %11 = vector.load %arg5[%c0_9, %c0_10] : memref<1x128xf32, #tpu.memory_space<vmem>>, vector<1x128xf32>
    %12 = vector.broadcast %11 : vector<1x128xf32> to vector<16x128xf32>
    %13 = arith.addf %10, %12 : vector<16x128xf32>
    %14 = arith.extf %0 : vector<16x128xbf16> to vector<16x128xf32>
    %15 = arith.addf %13, %14 : vector<16x128xf32>
    %cst_11 = arith.constant dense<0.000000e+00> : vector<16xf32>
    %16 = vector.multi_reduction <add>, %15, %cst_11 [1] : vector<16x128xf32> to vector<16xf32>
    %17 = vector.shape_cast %16 : vector<16xf32> to vector<16x1xf32>
    %cst_12 = arith.constant 3.125000e-02 : f32
    %18 = vector.broadcast %cst_12 : f32 to vector<16x1xf32>
    %19 = arith.mulf %17, %18 : vector<16x1xf32>
    %20 = arith.mulf %15, %15 : vector<16x128xf32>
    %cst_13 = arith.constant dense<0.000000e+00> : vector<16xf32>
    %21 = vector.multi_reduction <add>, %20, %cst_13 [1] : vector<16x128xf32> to vector<16xf32>
    %22 = vector.shape_cast %21 : vector<16xf32> to vector<16x1xf32>
    %cst_14 = arith.constant 3.125000e-02 : f32
    %23 = vector.broadcast %cst_14 : f32 to vector<16x1xf32>
    %24 = arith.mulf %22, %23 : vector<16x1xf32>
    %25 = arith.mulf %19, %19 : vector<16x1xf32>
    %26 = arith.subf %24, %25 : vector<16x1xf32>
    %27 = vector.broadcast %19 : vector<16x1xf32> to vector<16x128xf32>
    %28 = arith.subf %15, %27 : vector<16x128xf32>
    %cst_15 = arith.constant 9.99999974E-6 : f32
    %29 = vector.broadcast %cst_15 : f32 to vector<16x1xf32>
    %30 = arith.addf %26, %29 : vector<16x1xf32>
    %31 = math.rsqrt %30 : vector<16x1xf32>
    %32 = vector.broadcast %31 : vector<16x1xf32> to vector<16x128xf32>
    %33 = arith.mulf %28, %32 : vector<16x128xf32>
    %c0_16 = arith.constant 0 : index
    %c0_17 = arith.constant 0 : index
    %34 = vector.load %arg6[%c0_16, %c0_17] : memref<1x128xf32, #tpu.memory_space<vmem>>, vector<1x128xf32>
    %35 = vector.broadcast %34 : vector<1x128xf32> to vector<16x128xf32>
    %36 = arith.mulf %33, %35 : vector<16x128xf32>
    %c0_18 = arith.constant 0 : index
    %c0_19 = arith.constant 0 : index
    %37 = vector.load %arg7[%c0_18, %c0_19] : memref<1x128xf32, #tpu.memory_space<vmem>>, vector<1x128xf32>
    %38 = vector.broadcast %37 : vector<1x128xf32> to vector<16x128xf32>
    %39 = arith.addf %36, %38 : vector<16x128xf32>
    %40 = arith.truncf %39 : vector<16x128xf32> to vector<16x128xbf16>
    %c0_20 = arith.constant 0 : index
    %c0_21 = arith.constant 0 : index
    %41 = vector.load %arg8[%c0_20, %c0_21] : memref<128x128xbf16, #tpu.memory_space<vmem>>, vector<128x128xbf16>
    %cst_22 = arith.constant dense<0.000000e+00> : vector<16x128xf32>
    %42 = tpu.matmul %40, %41, %cst_22 {dimension_numbers = #tpu.dot_dimension_numbers<[1], [0], [0], [1], [0, 0, 1, 1], [], []>} : vector<16x128xbf16>, vector<128x128xbf16>, vector<16x128xf32> -> vector<16x128xf32>
    %c0_23 = arith.constant 0 : index
    %c0_24 = arith.constant 0 : index
    %43 = vector.load %arg9[%c0_23, %c0_24] : memref<1x128xf32, #tpu.memory_space<vmem>>, vector<1x128xf32>
    %44 = vector.broadcast %43 : vector<1x128xf32> to vector<16x128xf32>
    %45 = arith.addf %42, %44 : vector<16x128xf32>
    %c0_25 = arith.constant 0 : index
    %c0_26 = arith.constant 0 : index
    %46 = vector.load %arg10[%c0_25, %c0_26] : memref<128x128xbf16, #tpu.memory_space<vmem>>, vector<128x128xbf16>
    %cst_27 = arith.constant dense<0.000000e+00> : vector<16x128xf32>
    %47 = tpu.matmul %40, %46, %cst_27 {dimension_numbers = #tpu.dot_dimension_numbers<[1], [0], [0], [1], [0, 0, 1, 1], [], []>} : vector<16x128xbf16>, vector<128x128xbf16>, vector<16x128xf32> -> vector<16x128xf32>
    %c0_28 = arith.constant 0 : index
    %c0_29 = arith.constant 0 : index
    %48 = vector.load %arg11[%c0_28, %c0_29] : memref<1x128xf32, #tpu.memory_space<vmem>>, vector<1x128xf32>
    %49 = vector.broadcast %48 : vector<1x128xf32> to vector<16x128xf32>
    %50 = arith.addf %47, %49 : vector<16x128xf32>
    %c0_30 = arith.constant 0 : index
    %c0_31 = arith.constant 0 : index
    %51 = vector.load %arg12[%c0_30, %c0_31] : memref<16x128xf32, #tpu.memory_space<vmem>>, vector<16x128xf32>
    tpu.vector_store %arg12[%c0_30, %c0_31], %45 {strides = array<i32>} : memref<16x128xf32, #tpu.memory_space<vmem>>, vector<16x128xf32>,
    %c0_32 = arith.constant 0 : index
    %c0_33 = arith.constant 0 : index
    %52 = vector.load %arg13[%c0_32, %c0_33] : memref<16x128xf32, #tpu.memory_space<vmem>>, vector<16x128xf32>
    tpu.vector_store %arg13[%c0_32, %c0_33], %50 {strides = array<i32>} : memref<16x128xf32, #tpu.memory_space<vmem>>, vector<16x128xf32>,
    return
  }
  func.func @transform_0(%arg0: i32) -> (i32, i32) {
    %c0_i32 = arith.constant 0 : i32
    %c0_i32_0 = arith.constant 0 : i32
    return %arg0, %c0_i32 : i32, i32
  }
  func.func @transform_1(%arg0: i32) -> (i32, i32) {
    %c0_i32 = arith.constant 0 : i32
    %c0_i32_0 = arith.constant 0 : i32
    %c0_i32_1 = arith.constant 0 : i32
    return %c0_i32, %c0_i32_0 : i32, i32
  }
  func.func @transform_2(%arg0: i32) -> (i32, i32) {
    %c0_i32 = arith.constant 0 : i32
    %c0_i32_0 = arith.constant 0 : i32
    %c0_i32_1 = arith.constant 0 : i32
    return %c0_i32, %c0_i32_0 : i32, i32
  }
  func.func @transform_3(%arg0: i32) -> (i32, i32) {
    %c0_i32 = arith.constant 0 : i32
    %c0_i32_0 = arith.constant 0 : i32
    %c0_i32_1 = arith.constant 0 : i32
    return %c0_i32, %c0_i32_0 : i32, i32
  }
  func.func @transform_4(%arg0: i32) -> (i32, i32) {
    %c0_i32 = arith.constant 0 : i32
    %c0_i32_0 = arith.constant 0 : i32
    %c0_i32_1 = arith.constant 0 : i32
    return %c0_i32, %c0_i32_0 : i32, i32
  }
  func.func @transform_5(%arg0: i32) -> (i32, i32) {
    %c0_i32 = arith.constant 0 : i32
    %c0_i32_0 = arith.constant 0 : i32
    %c0_i32_1 = arith.constant 0 : i32
    return %c0_i32, %c0_i32_0 : i32, i32
  }
  func.func @transform_6(%arg0: i32) -> (i32, i32) {
    %c0_i32 = arith.constant 0 : i32
    %c0_i32_0 = arith.constant 0 : i32
    %c0_i32_1 = arith.constant 0 : i32
    return %c0_i32, %c0_i32_0 : i32, i32
  }
  func.func @transform_7(%arg0: i32) -> (i32, i32) {
    %c0_i32 = arith.constant 0 : i32
    %c0_i32_0 = arith.constant 0 : i32
    %c0_i32_1 = arith.constant 0 : i32
    return %c0_i32, %c0_i32_0 : i32, i32
  }
  func.func @transform_8(%arg0: i32) -> (i32, i32) {
    %c0_i32 = arith.constant 0 : i32
    %c0_i32_0 = arith.constant 0 : i32
    %c0_i32_1 = arith.constant 0 : i32
    return %c0_i32, %c0_i32_0 : i32, i32
  }
  func.func @transform_9(%arg0: i32) -> (i32, i32) {
    %c0_i32 = arith.constant 0 : i32
    %c0_i32_0 = arith.constant 0 : i32
    %c0_i32_1 = arith.constant 0 : i32
    return %c0_i32, %c0_i32_0 : i32, i32
  }
  func.func @transform_10(%arg0: i32) -> (i32, i32) {
    %c0_i32 = arith.constant 0 : i32
    %c0_i32_0 = arith.constant 0 : i32
    %c0_i32_1 = arith.constant 0 : i32
    return %c0_i32, %c0_i32_0 : i32, i32
  }
  func.func @transform_11(%arg0: i32) -> (i32, i32) {
    %c0_i32 = arith.constant 0 : i32
    %c0_i32_0 = arith.constant 0 : i32
    return %arg0, %c0_i32 : i32, i32
  }
  func.func @transform_12(%arg0: i32) -> (i32, i32) {
    %c0_i32 = arith.constant 0 : i32
    %c0_i32_0 = arith.constant 0 : i32
    return %arg0, %c0_i32 : i32, i32
  }
}

</mosaic_0001>

<llo_original>
// kernel: tpu_custom_call.1
$region0: #{tpu_custom_call.1}
  #allocation0 [shape = 'u32[]', space=smem, size = 0x4, offset = 0x4, fixed_abs, tag = 'smem constant byte address 0x4 - core index']
  #allocation1 [shape = 'u32[144,128]{1,0:T(1,128)}', space=vmem, size = 0x12000, scoped, tag = 'internal scratch']
  %s0 = inlined_call_operand.hbm [shape: bf16[16,128], index: 0, kind: input, shape index: {}]
  %s1 = inlined_call_operand.hbm [shape: bf16[128,128], index: 1, kind: input, shape index: {}]
  %s2 = inlined_call_operand.vmem [shape: f32[1,128], index: 2, kind: input, shape index: {}]
  %s3 = inlined_call_operand.hbm [shape: bf16[128,128], index: 3, kind: input, shape index: {}]
  %s4 = inlined_call_operand.vmem [shape: f32[1,128], index: 4, kind: input, shape index: {}]
  %s5 = inlined_call_operand.vmem [shape: f32[1,128], index: 5, kind: input, shape index: {}]
  %s6 = inlined_call_operand.vmem [shape: f32[1,128], index: 6, kind: input, shape index: {}]
  %s7 = inlined_call_operand.hbm [shape: bf16[128,128], index: 7, kind: input, shape index: {}]
  %s8 = inlined_call_operand.vmem [shape: f32[1,128], index: 8, kind: input, shape index: {}]
  %s9 = inlined_call_operand.hbm [shape: bf16[128,128], index: 9, kind: input, shape index: {}]
  %s10 = inlined_call_operand.vmem [shape: f32[1,128], index: 10, kind: input, shape index: {}]
  %s11 = inlined_call_operand.hbm [shape: f32[16,128], index: 11, kind: output, shape index: {0}]
  %s12 = inlined_call_operand.hbm [shape: f32[16,128], index: 12, kind: output, shape index: {1}]
  %13 = xla_tuple %s11, %s12
  %s14 = sld [smem:[#allocation0]]
  $region82: #{tpu_custom_call.1} parent=0
    _
  %s16 = ssub.s32 1, %s14
  %s17 = scalar_select 0, %s16, %s14
  $region1: #{tpu_custom_call.1} parent=0
    #allocation2 [shape = 'u8[4096]{0}', space=vmem, size = 0x1000, scoped, tag = 'input window, operand 0, single buffered']
    #allocation3 [shape = 's32[1]{0}', space=sflag, size = 0x4, scoped, tag = 'scoped memory for tpu_custom_call.1']
    #allocation4 [shape = 's32[1]{0}', space=sflag, size = 0x4, scoped, tag = 'scoped memory for tpu_custom_call.1']
    #allocation5 [shape = 'u8[32768]{0}', space=vmem, size = 0x8000, scoped, tag = 'input window, operand 1, single buffered']
    #allocation6 [shape = 's32[1]{0}', space=sflag, size = 0x4, scoped, tag = 'scoped memory for tpu_custom_call.1']
    #allocation7 [shape = 'u8[32768]{0}', space=vmem, size = 0x8000, scoped, tag = 'input window, operand 3, single buffered']
    #allocation8 [shape = 'u8[32768]{0}', space=vmem, size = 0x8000, scoped, tag = 'input window, operand 7, single buffered']
    #allocation9 [shape = 's32[1]{0}', space=sflag, size = 0x4, scoped, tag = 'scoped memory for tpu_custom_call.1']
    #allocation10 [shape = 'u8[32768]{0}', space=vmem, size = 0x8000, scoped, tag = 'input window, operand 9, single buffered']
    #allocation11 [shape = 'u8[8192]{0}', space=vmem, size = 0x2000, scoped, tag = 'output window, operand 0, single buffered']
    #allocation12 [shape = 'u8[8192]{0}', space=vmem, size = 0x2000, scoped, tag = 'output window, operand 1, single buffered']
    #allocation13 [shape = 's32[1]{0}', space=sflag, size = 0x4, scoped, tag = 'scoped memory for tpu_custom_call.1']
    %18 = vsyncpa [#allocation3], 0
    %19 = vsyncpa [#allocation6], 0
    %20 = vsyncpa [#allocation9], 0
    %21 = vsyncpa [#allocation4], 0
    %22 = vsyncpa [#allocation13], 0
    // Predicated region
    $region2: #{tpu_custom_call.1} parent=1 // pred_check
      _
    $region3: #{tpu_custom_call.1} parent=1 // pred_check_branch
      %24 = sbr.rel (0) target = $region5
    $region4: #{tpu_custom_call.1} parent=1 // pred_region
      %s26 = ssub.s32 128, 128
      %27 = vsyncadd [#allocation3], %s26
      %s28 = sshll.u32 [#allocation2], 4
      %s29 = int_to_ptr.vmem [resolvable:$true] %s28
      %34 = dma.hbm_to_vmem [thread:$0]  %s0, 128, %s29, [#allocation3], 64, 64, 4
    $region5: #{tpu_custom_call.1} parent=1 // pred_fallthru
      _
    // Predicated region
    $region6: #{tpu_custom_call.1} parent=1 // pred_check
      _
    $region7: #{tpu_custom_call.1} parent=1 // pred_check_branch
      %36 = sbr.rel (0) target = $region9
    $region8: #{tpu_custom_call.1} parent=1 // pred_region
      %s38 = ssub.s32 1024, 1024
      %39 = vsyncadd [#allocation6], %s38
      %s40 = sshll.u32 [#allocation5], 4
      %s41 = int_to_ptr.vmem [resolvable:$true] %s40
      %46 = dma.hbm_to_vmem [thread:$0]  %s1, 1024, %s41, [#allocation6], 64, 64, 4
    $region9: #{tpu_custom_call.1} parent=1 // pred_fallthru
      _
    // Predicated region
    $region10: #{tpu_custom_call.1} parent=1 // pred_check
      _
    $region11: #{tpu_custom_call.1} parent=1 // pred_check_branch
      %48 = sbr.rel (0) target = $region13
    $region12: #{tpu_custom_call.1} parent=1 // pred_region
      _
    $region13: #{tpu_custom_call.1} parent=1 // pred_fallthru
      _
    // Predicated region
    $region14: #{tpu_custom_call.1} parent=1 // pred_check
      _
    $region15: #{tpu_custom_call.1} parent=1 // pred_check_branch
      %50 = sbr.rel (0) target = $region17
    $region16: #{tpu_custom_call.1} parent=1 // pred_region
      %s52 = ssub.s32 1024, 1024
      %53 = vsyncadd [#allocation6], %s52
      %s54 = sshll.u32 [#allocation7], 4
      %s55 = int_to_ptr.vmem [resolvable:$true] %s54
      %60 = dma.hbm_to_vmem [thread:$0]  %s3, 1024, %s55, [#allocation6], 64, 64, 4
    $region17: #{tpu_custom_call.1} parent=1 // pred_fallthru
      _
    // Predicated region
    $region18: #{tpu_custom_call.1} parent=1 // pred_check
      _
    $region19: #{tpu_custom_call.1} parent=1 // pred_check_branch
      %62 = sbr.rel (0) target = $region21
    $region20: #{tpu_custom_call.1} parent=1 // pred_region
      _
    $region21: #{tpu_custom_call.1} parent=1 // pred_fallthru
      _
    // Predicated region
    $region22: #{tpu_custom_call.1} parent=1 // pred_check
      _
    $region23: #{tpu_custom_call.1} parent=1 // pred_check_branch
      %64 = sbr.rel (0) target = $region25
    $region24: #{tpu_custom_call.1} parent=1 // pred_region
      _
    $region25: #{tpu_custom_call.1} parent=1 // pred_fallthru
      _
    // Predicated region
    $region26: #{tpu_custom_call.1} parent=1 // pred_check
      _
    $region27: #{tpu_custom_call.1} parent=1 // pred_check_branch
      %66 = sbr.rel (0) target = $region29
    $region28: #{tpu_custom_call.1} parent=1 // pred_region
      _
    $region29: #{tpu_custom_call.1} parent=1 // pred_fallthru
      _
    // Predicated region
    $region30: #{tpu_custom_call.1} parent=1 // pred_check
      _
    $region31: #{tpu_custom_call.1} parent=1 // pred_check_branch
      %68 = sbr.rel (0) target = $region33
    $region32: #{tpu_custom_call.1} parent=1 // pred_region
      %s70 = ssub.s32 1024, 1024
      %71 = vsyncadd [#allocation9], %s70
      %s72 = sshll.u32 [#allocation8], 4
      %s73 = int_to_ptr.vmem [resolvable:$true] %s72
      %78 = dma.hbm_to_vmem [thread:$0]  %s7, 1024, %s73, [#allocation9], 64, 64, 4
    $region33: #{tpu_custom_call.1} parent=1 // pred_fallthru
      _
    // Predicated region
    $region34: #{tpu_custom_call.1} parent=1 // pred_check
      _
    $region35: #{tpu_custom_call.1} parent=1 // pred_check_branch
      %80 = sbr.rel (0) target = $region37
    $region36: #{tpu_custom_call.1} parent=1 // pred_region
      _
    $region37: #{tpu_custom_call.1} parent=1 // pred_fallthru
      _
    // Predicated region
    $region38: #{tpu_custom_call.1} parent=1 // pred_check
      _
    $region39: #{tpu_custom_call.1} parent=1 // pred_check_branch
      %82 = sbr.rel (0) target = $region41
    $region40: #{tpu_custom_call.1} parent=1 // pred_region
      %s84 = ssub.s32 1024, 1024
      %85 = vsyncadd [#allocation9], %s84
      %s86 = sshll.u32 [#allocation10], 4
      %s87 = int_to_ptr.vmem [resolvable:$true] %s86
      %92 = dma.hbm_to_vmem [thread:$0]  %s9, 1024, %s87, [#allocation9], 64, 64, 4
    $region41: #{tpu_custom_call.1} parent=1 // pred_fallthru
      _
    // Predicated region
    $region42: #{tpu_custom_call.1} parent=1 // pred_check
      _
    $region43: #{tpu_custom_call.1} parent=1 // pred_check_branch
      %94 = sbr.rel (0) target = $region45
    $region44: #{tpu_custom_call.1} parent=1 // pred_region
      _
    $region45: #{tpu_custom_call.1} parent=1 // pred_fallthru
      _
    // Predicated region
    $region46: #{tpu_custom_call.1} parent=1 // pred_check
      _
    $region47: #{tpu_custom_call.1} parent=1 // pred_check_branch
      %96 = sbr.rel (0) target = $region49
    $region48: #{tpu_custom_call.1} parent=1 // pred_region
      %97 = dma.done [#allocation3], 128
    $region49: #{tpu_custom_call.1} parent=1 // pred_fallthru
      _
    // Predicated region
    $region50: #{tpu_custom_call.1} parent=1 // pred_check
      _
    $region51: #{tpu_custom_call.1} parent=1 // pred_check_branch
      %99 = sbr.rel (0) target = $region53
    $region52: #{tpu_custom_call.1} parent=1 // pred_region
      %100 = dma.done [#allocation6], 1024
    $region53: #{tpu_custom_call.1} parent=1 // pred_fallthru
      _
    // Predicated region
    $region54: #{tpu_custom_call.1} parent=1 // pred_check
      _
    $region55: #{tpu_custom_call.1} parent=1 // pred_check_branch
      %102 = sbr.rel (0) target = $region57
    $region56: #{tpu_custom_call.1} parent=1 // pred_region
      %103 = dma.done [#allocation6], 1024
    $region57: #{tpu_custom_call.1} parent=1 // pred_fallthru
      _
    // Predicated region
    $region58: #{tpu_custom_call.1} parent=1 // pred_check
      _
    $region59: #{tpu_custom_call.1} parent=1 // pred_check_branch
      %105 = sbr.rel (0) target = $region61
    $region60: #{tpu_custom_call.1} parent=1 // pred_region
      %106 = dma.done [#allocation9], 1024
    $region61: #{tpu_custom_call.1} parent=1 // pred_fallthru
      _
    // Predicated region
    $region62: #{tpu_custom_call.1} parent=1 // pred_check
      _
    $region63: #{tpu_custom_call.1} parent=1 // pred_check_branch
      %108 = sbr.rel (0) target = $region65
    $region64: #{tpu_custom_call.1} parent=1 // pred_region
      %109 = dma.done [#allocation9], 1024
    $region65: #{tpu_custom_call.1} parent=1 // pred_fallthru
      _
    %v111 = vld [vmem:[#allocation2] sm:$0xf]
    %v112 = vld [vmem:[#allocation2 + $0x4] sm:$0xf]
    %v113 = vld [vmem:[#allocation5] sm:$0xf]
    %v114 = vld [vmem:[#allocation5 + $0x4] sm:$0xf]
    %v115 = vld [vmem:[#allocation5 + $0x8] sm:$0xf]
    %v116 = vld [vmem:[#allocation5 + $0xc] sm:$0xf]
    %v117 = vld [vmem:[#allocation5 + $0x10] sm:$0xf]
    %v118 = vld [vmem:[#allocation5 + $0x14] sm:$0xf]
    %v119 = vld [vmem:[#allocation5 + $0x18] sm:$0xf]
    %v120 = vld [vmem:[#allocation5 + $0x1c] sm:$0xf]
    %v121 = vld [vmem:[#allocation5 + $0x20] sm:$0xf]
    %v122 = vld [vmem:[#allocation5 + $0x24] sm:$0xf]
    %v123 = vld [vmem:[#allocation5 + $0x28] sm:$0xf]
    %v124 = vld [vmem:[#allocation5 + $0x2c] sm:$0xf]
    %v125 = vld [vmem:[#allocation5 + $0x30] sm:$0xf]
    %v126 = vld [vmem:[#allocation5 + $0x34] sm:$0xf]
    %v127 = vld [vmem:[#allocation5 + $0x38] sm:$0xf]
    %v128 = vld [vmem:[#allocation5 + $0x3c] sm:$0xf]
    %v129 = vld [vmem:[%s2] sm:$0x1]
    %v131 = vlaneseq
    %v132 = vshrl.u32 %v131, 7
    %v133 = vsub.s32 0, %v132
    %v134 = vrot.slane %v129, %v133
    %v138 = vunpack.c.l.b16 %v111
    %v139 = vunpack.c.l.b16 %v112
    %v140 = vpack.c.b16 %v139, %v138
    %v158 = vunpack.c.l.b16 %v113
    %v159 = vunpack.c.l.b16 %v114
    %v160 = vunpack.c.l.b16 %v115
    %v161 = vunpack.c.l.b16 %v116
    %v162 = vunpack.c.l.b16 %v117
    %v163 = vunpack.c.l.b16 %v118
    %v164 = vunpack.c.l.b16 %v119
    %v165 = vunpack.c.l.b16 %v120
    %v166 = vunpack.c.l.b16 %v121
    %v167 = vunpack.c.l.b16 %v122
    %v168 = vunpack.c.l.b16 %v123
    %v169 = vunpack.c.l.b16 %v124
    %v170 = vunpack.c.l.b16 %v125
    %v171 = vunpack.c.l.b16 %v126
    %v172 = vunpack.c.l.b16 %v127
    %v173 = vunpack.c.l.b16 %v128
    %v174 = vpack.c.b16 %v159, %v158
    %v175 = vpack.c.b16 %v161, %v160
    %v176 = vpack.c.b16 %v163, %v162
    %v177 = vpack.c.b16 %v165, %v164
    %v178 = vpack.c.b16 %v167, %v166
    %v179 = vpack.c.b16 %v169, %v168
    %v180 = vpack.c.b16 %v171, %v170
    %v181 = vpack.c.b16 %v173, %v172
    %190 = vmatprep.subr.bf16.mxu0 0
    %191 = vmatpush1.bf16.msra.mxu0 %v181
    %192 = vmatprep.subr.bf16.mxu0 0
    %193 = vmatpush1.bf16.msra.mxu0 %v180
    %194 = vmatprep.subr.bf16.mxu0 0
    %195 = vmatpush1.bf16.msra.mxu0 %v179
    %196 = vmatprep.subr.bf16.mxu0 0
    %197 = vmatpush1.bf16.msra.mxu0 %v178
    %198 = vmatprep.subr.bf16.mxu0 0
    %199 = vmatpush1.bf16.msra.mxu0 %v177
    %200 = vmatprep.subr.bf16.mxu0 0
    %201 = vmatpush1.bf16.msra.mxu0 %v176
    %202 = vmatprep.subr.bf16.mxu0 0
    %203 = vmatpush1.bf16.msra.mxu0 %v175
    %204 = vmatprep.subr.bf16.mxu0 0
    %205 = vmatpush1.bf16.msra.mxu0 %v174
    %206 = vmatprep.subr.bf16.mxu0 0
    %207 = vmatpush2.bf16.msra.mxu0 0
    %208 = vmatprep.subr.bf16.mxu0 0
    %209 = vmatpush2.bf16.msra.mxu0 0
    %210 = vmatprep.subr.bf16.mxu0 0
    %211 = vmatpush2.bf16.msra.mxu0 0
    %212 = vmatprep.subr.bf16.mxu0 0
    %213 = vmatpush2.bf16.msra.mxu0 0
    %214 = vmatprep.subr.bf16.mxu0 0
    %215 = vmatpush2.bf16.msra.mxu0 0
    %216 = vmatprep.subr.bf16.mxu0 0
    %217 = vmatpush2.bf16.msra.mxu0 0
    %218 = vmatprep.subr.bf16.mxu0 0
    %219 = vmatpush2.bf16.msra.mxu0 0
    %220 = vmatprep.subr.bf16.mxu0 0
    %221 = vmatpush2.bf16.msra.mxu0 0
    %222 = vmatprep.mubr.bf16.mxu0 0
    %223 = vmatmul.mubr.bf16.gmra.mxu0 %v140
    %v224 = vpop.f32.mrf.mxu0
    %v225 = vadd.f32 %v134, %v224
    %v226 = vpop.f32.mrf.mxu0
    %v227 = vpop.f32.mrf.mxu0
    %v228 = vadd.f32 %v134, %v227
    %v229 = vpop.f32.mrf.mxu0
    %230 = vdwg.mxu0
    %v231 = vmax.f32 %v225, 0.0
    %v232 = vmax.f32 %v228, 0.0
    %v233 = vpack.c.bf16 %v232, %v231
    %v234 = vld [vmem:[#allocation7] sm:$0xf]
    %v235 = vld [vmem:[#allocation7 + $0x4] sm:$0xf]
    %v236 = vld [vmem:[#allocation7 + $0x8] sm:$0xf]
    %v237 = vld [vmem:[#allocation7 + $0xc] sm:$0xf]
    %v238 = vld [vmem:[#allocation7 + $0x10] sm:$0xf]
    %v239 = vld [vmem:[#allocation7 + $0x14] sm:$0xf]
    %v240 = vld [vmem:[#allocation7 + $0x18] sm:$0xf]
    %v241 = vld [vmem:[#allocation7 + $0x1c] sm:$0xf]
    %v242 = vld [vmem:[#allocation7 + $0x20] sm:$0xf]
    %v243 = vld [vmem:[#allocation7 + $0x24] sm:$0xf]
    %v244 = vld [vmem:[#allocation7 + $0x28] sm:$0xf]
    %v245 = vld [vmem:[#allocation7 + $0x2c] sm:$0xf]
    %v246 = vld [vmem:[#allocation7 + $0x30] sm:$0xf]
    %v247 = vld [vmem:[#allocation7 + $0x34] sm:$0xf]
    %v248 = vld [vmem:[#allocation7 + $0x38] sm:$0xf]
    %v249 = vld [vmem:[#allocation7 + $0x3c] sm:$0xf]
    %v250 = vld [vmem:[%s4] sm:$0x1]
    %v252 = vlaneseq
    %v253 = vshrl.u32 %v252, 7
    %v254 = vsub.s32 0, %v253
    %v255 = vrot.slane %v250, %v254
    %v273 = vunpack.c.l.b16 %v234
    %v274 = vunpack.c.l.b16 %v235
    %v275 = vunpack.c.l.b16 %v236
    %v276 = vunpack.c.l.b16 %v237
    %v277 = vunpack.c.l.b16 %v238
    %v278 = vunpack.c.l.b16 %v239
    %v279 = vunpack.c.l.b16 %v240
    %v280 = vunpack.c.l.b16 %v241
    %v281 = vunpack.c.l.b16 %v242
    %v282 = vunpack.c.l.b16 %v243
    %v283 = vunpack.c.l.b16 %v244
    %v284 = vunpack.c.l.b16 %v245
    %v285 = vunpack.c.l.b16 %v246
    %v286 = vunpack.c.l.b16 %v247
    %v287 = vunpack.c.l.b16 %v248
    %v288 = vunpack.c.l.b16 %v249
    %v289 = vpack.c.b16 %v274, %v273
    %v290 = vpack.c.b16 %v276, %v275
    %v291 = vpack.c.b16 %v278, %v277
    %v292 = vpack.c.b16 %v280, %v279
    %v293 = vpack.c.b16 %v282, %v281
    %v294 = vpack.c.b16 %v284, %v283
    %v295 = vpack.c.b16 %v286, %v285
    %v296 = vpack.c.b16 %v288, %v287
    %305 = vmatprep.subr.bf16.mxu0 0
    %306 = vmatpush1.bf16.msra.mxu0 %v296
    %307 = vmatprep.subr.bf16.mxu0 0
    %308 = vmatpush1.bf16.msra.mxu0 %v295
    %309 = vmatprep.subr.bf16.mxu0 0
    %310 = vmatpush1.bf16.msra.mxu0 %v294
    %311 = vmatprep.subr.bf16.mxu0 0
    %312 = vmatpush1.bf16.msra.mxu0 %v293
    %313 = vmatprep.subr.bf16.mxu0 0
    %314 = vmatpush1.bf16.msra.mxu0 %v292
    %315 = vmatprep.subr.bf16.mxu0 0
    %316 = vmatpush1.bf16.msra.mxu0 %v291
    %317 = vmatprep.subr.bf16.mxu0 0
    %318 = vmatpush1.bf16.msra.mxu0 %v290
    %319 = vmatprep.subr.bf16.mxu0 0
    %320 = vmatpush1.bf16.msra.mxu0 %v289
    %321 = vmatprep.subr.bf16.mxu0 0
    %322 = vmatpush2.bf16.msra.mxu0 0
    %323 = vmatprep.subr.bf16.mxu0 0
    %324 = vmatpush2.bf16.msra.mxu0 0
    %325 = vmatprep.subr.bf16.mxu0 0
    %326 = vmatpush2.bf16.msra.mxu0 0
    %327 = vmatprep.subr.bf16.mxu0 0
    %328 = vmatpush2.bf16.msra.mxu0 0
    %329 = vmatprep.subr.bf16.mxu0 0
    %330 = vmatpush2.bf16.msra.mxu0 0
    %331 = vmatprep.subr.bf16.mxu0 0
    %332 = vmatpush2.bf16.msra.mxu0 0
    %333 = vmatprep.subr.bf16.mxu0 0
    %334 = vmatpush2.bf16.msra.mxu0 0
    %335 = vmatprep.subr.bf16.mxu0 0
    %336 = vmatpush2.bf16.msra.mxu0 0
    %337 = vmatprep.mubr.bf16.mxu0 0
    %338 = vmatmul.mubr.bf16.gmra.mxu0 %v233
    %v339 = vpop.f32.mrf.mxu0
    %v340 = vadd.f32 %v255, %v339
    %v341 = vpop.f32.mrf.mxu0
    %v342 = vpop.f32.mrf.mxu0
    %v343 = vadd.f32 %v255, %v342
    %v344 = vpop.f32.mrf.mxu0
    %345 = vdwg.mxu0
    %v346 = vunpack.c.l.bf16 %v111
    %v347 = vunpack.c.l.bf16 %v112
    %v348 = vadd.f32 %v340, %v346
    %v349 = vadd.f32 %v343, %v347
    %350 = vadd.xlane.f32.xlu0 %v348
    %v351 = vpop.xlane.xlu0 %350
    %352 = vadd.xlane.f32.xlu0 %v349
    %v353 = vpop.xlane.xlu0 %352
    %v354 = vmul.f32 %v351, 0.03125
    %v355 = vmul.f32 %v353, 0.03125
    %v356 = vmul.f32 %v348, %v348
    %v357 = vmul.f32 %v349, %v349
    %358 = vadd.xlane.f32.xlu0 %v356
    %v359 = vpop.xlane.xlu0 %358
    %360 = vadd.xlane.f32.xlu0 %v357
    %v361 = vpop.xlane.xlu0 %360
    %v362 = vmul.f32 %v359, 0.03125
    %v363 = vmul.f32 %v361, 0.03125
    %v364 = vmul.f32 %v354, %v354
    %v365 = vmul.f32 %v355, %v355
    %v366 = vsub.f32 %v362, %v364
    %v367 = vsub.f32 %v363, %v365
    %v368 = vsub.f32 %v348, %v354
    %v369 = vsub.f32 %v349, %v355
    %v370 = vadd.f32 %v366, 1e-05
    %v371 = vadd.f32 %v367, 1e-05
    %v372 = vrsqrt.pop %v370
    %v373 = vrsqrt.pop %v371
    %v374 = vmul.f32 %v368, %v372
    %v375 = vmul.f32 %v369, %v373
    %v376 = vld [vmem:[%s5] sm:$0x1]
    %v378 = vlaneseq
    %v379 = vshrl.u32 %v378, 7
    %v380 = vsub.s32 0, %v379
    %v381 = vrot.slane %v376, %v380
    %v383 = vmul.f32 %v374, %v381
    %v384 = vmul.f32 %v375, %v381
    %v385 = vld [vmem:[%s6] sm:$0x1]
    %v387 = vlaneseq
    %v388 = vshrl.u32 %v387, 7
    %v389 = vsub.s32 0, %v388
    %v390 = vrot.slane %v385, %v389
    %v392 = vadd.f32 %v383, %v390
    %v393 = vadd.f32 %v384, %v390
    %v394 = vpack.c.bf16 %v393, %v392
    %v395 = vld [vmem:[#allocation8] sm:$0xf]
    %v396 = vld [vmem:[#allocation8 + $0x4] sm:$0xf]
    %v397 = vld [vmem:[#allocation8 + $0x8] sm:$0xf]
    %v398 = vld [vmem:[#allocation8 + $0xc] sm:$0xf]
    %v399 = vld [vmem:[#allocation8 + $0x10] sm:$0xf]
    %v400 = vld [vmem:[#allocation8 + $0x14] sm:$0xf]
    %v401 = vld [vmem:[#allocation8 + $0x18] sm:$0xf]
    %v402 = vld [vmem:[#allocation8 + $0x1c] sm:$0xf]
    %v403 = vld [vmem:[#allocation8 + $0x20] sm:$0xf]
    %v404 = vld [vmem:[#allocation8 + $0x24] sm:$0xf]
    %v405 = vld [vmem:[#allocation8 + $0x28] sm:$0xf]
    %v406 = vld [vmem:[#allocation8 + $0x2c] sm:$0xf]
    %v407 = vld [vmem:[#allocation8 + $0x30] sm:$0xf]
    %v408 = vld [vmem:[#allocation8 + $0x34] sm:$0xf]
    %v409 = vld [vmem:[#allocation8 + $0x38] sm:$0xf]
    %v410 = vld [vmem:[#allocation8 + $0x3c] sm:$0xf]
    %v411 = vld [vmem:[%s8] sm:$0x1]
    %v413 = vlaneseq
    %v414 = vshrl.u32 %v413, 7
    %v415 = vsub.s32 0, %v414
    %v416 = vrot.slane %v411, %v415
    %v434 = vunpack.c.l.b16 %v395
    %v435 = vunpack.c.l.b16 %v396
    %v436 = vunpack.c.l.b16 %v397
    %v437 = vunpack.c.l.b16 %v398
    %v438 = vunpack.c.l.b16 %v399
    %v439 = vunpack.c.l.b16 %v400
    %v440 = vunpack.c.l.b16 %v401
    %v441 = vunpack.c.l.b16 %v402
    %v442 = vunpack.c.l.b16 %v403
    %v443 = vunpack.c.l.b16 %v404
    %v444 = vunpack.c.l.b16 %v405
    %v445 = vunpack.c.l.b16 %v406
    %v446 = vunpack.c.l.b16 %v407
    %v447 = vunpack.c.l.b16 %v408
    %v448 = vunpack.c.l.b16 %v409
    %v449 = vunpack.c.l.b16 %v410
    %v450 = vpack.c.b16 %v435, %v434
    %v451 = vpack.c.b16 %v437, %v436
    %v452 = vpack.c.b16 %v439, %v438
    %v453 = vpack.c.b16 %v441, %v440
    %v454 = vpack.c.b16 %v443, %v442
    %v455 = vpack.c.b16 %v445, %v444
    %v456 = vpack.c.b16 %v447, %v446
    %v457 = vpack.c.b16 %v449, %v448
    %466 = vmatprep.subr.bf16.mxu0 0
    %467 = vmatpush1.bf16.msra.mxu0 %v457
    %468 = vmatprep.subr.bf16.mxu0 0
    %469 = vmatpush1.bf16.msra.mxu0 %v456
    %470 = vmatprep.subr.bf16.mxu0 0
    %471 = vmatpush1.bf16.msra.mxu0 %v455
    %472 = vmatprep.subr.bf16.mxu0 0
    %473 = vmatpush1.bf16.msra.mxu0 %v454
    %474 = vmatprep.subr.bf16.mxu0 0
    %475 = vmatpush1.bf16.msra.mxu0 %v453
    %476 = vmatprep.subr.bf16.mxu0 0
    %477 = vmatpush1.bf16.msra.mxu0 %v452
    %478 = vmatprep.subr.bf16.mxu0 0
    %479 = vmatpush1.bf16.msra.mxu0 %v451
    %480 = vmatprep.subr.bf16.mxu0 0
    %481 = vmatpush1.bf16.msra.mxu0 %v450
    %482 = vmatprep.subr.bf16.mxu0 0
    %483 = vmatpush2.bf16.msra.mxu0 0
    %484 = vmatprep.subr.bf16.mxu0 0
    %485 = vmatpush2.bf16.msra.mxu0 0
    %486 = vmatprep.subr.bf16.mxu0 0
    %487 = vmatpush2.bf16.msra.mxu0 0
    %488 = vmatprep.subr.bf16.mxu0 0
    %489 = vmatpush2.bf16.msra.mxu0 0
    %490 = vmatprep.subr.bf16.mxu0 0
    %491 = vmatpush2.bf16.msra.mxu0 0
    %492 = vmatprep.subr.bf16.mxu0 0
    %493 = vmatpush2.bf16.msra.mxu0 0
    %494 = vmatprep.subr.bf16.mxu0 0
    %495 = vmatpush2.bf16.msra.mxu0 0
    %496 = vmatprep.subr.bf16.mxu0 0
    %497 = vmatpush2.bf16.msra.mxu0 0
    %498 = vmatprep.mubr.bf16.mxu0 0
    %499 = vmatmul.mubr.bf16.gmra.mxu0 %v394
    %v500 = vpop.f32.mrf.mxu0
    %v501 = vadd.f32 %v416, %v500
    %v502 = vpop.f32.mrf.mxu0
    %v503 = vpop.f32.mrf.mxu0
    %v504 = vadd.f32 %v416, %v503
    %v505 = vpop.f32.mrf.mxu0
    %506 = vdwg.mxu0
    %v507 = vld [vmem:[#allocation10] sm:$0xf]
    %v508 = vld [vmem:[#allocation10 + $0x4] sm:$0xf]
    %v509 = vld [vmem:[#allocation10 + $0x8] sm:$0xf]
    %v510 = vld [vmem:[#allocation10 + $0xc] sm:$0xf]
    %v511 = vld [vmem:[#allocation10 + $0x10] sm:$0xf]
    %v512 = vld [vmem:[#allocation10 + $0x14] sm:$0xf]
    %v513 = vld [vmem:[#allocation10 + $0x18] sm:$0xf]
    %v514 = vld [vmem:[#allocation10 + $0x1c] sm:$0xf]
    %v515 = vld [vmem:[#allocation10 + $0x20] sm:$0xf]
    %v516 = vld [vmem:[#allocation10 + $0x24] sm:$0xf]
    %v517 = vld [vmem:[#allocation10 + $0x28] sm:$0xf]
    %v518 = vld [vmem:[#allocation10 + $0x2c] sm:$0xf]
    %v519 = vld [vmem:[#allocation10 + $0x30] sm:$0xf]
    %v520 = vld [vmem:[#allocation10 + $0x34] sm:$0xf]
    %v521 = vld [vmem:[#allocation10 + $0x38] sm:$0xf]
    %v522 = vld [vmem:[#allocation10 + $0x3c] sm:$0xf]
    %v523 = vld [vmem:[%s10] sm:$0x1]
    %v525 = vlaneseq
    %v526 = vshrl.u32 %v525, 7
    %v527 = vsub.s32 0, %v526
    %v528 = vrot.slane %v523, %v527
    %v546 = vunpack.c.l.b16 %v507
    %v547 = vunpack.c.l.b16 %v508
    %v548 = vunpack.c.l.b16 %v509
    %v549 = vunpack.c.l.b16 %v510
    %v550 = vunpack.c.l.b16 %v511
    %v551 = vunpack.c.l.b16 %v512
    %v552 = vunpack.c.l.b16 %v513
    %v553 = vunpack.c.l.b16 %v514
    %v554 = vunpack.c.l.b16 %v515
    %v555 = vunpack.c.l.b16 %v516
    %v556 = vunpack.c.l.b16 %v517
    %v557 = vunpack.c.l.b16 %v518
    %v558 = vunpack.c.l.b16 %v519
    %v559 = vunpack.c.l.b16 %v520
    %v560 = vunpack.c.l.b16 %v521
    %v561 = vunpack.c.l.b16 %v522
    %v562 = vpack.c.b16 %v547, %v546
    %v563 = vpack.c.b16 %v549, %v548
    %v564 = vpack.c.b16 %v551, %v550
    %v565 = vpack.c.b16 %v553, %v552
    %v566 = vpack.c.b16 %v555, %v554
    %v567 = vpack.c.b16 %v557, %v556
    %v568 = vpack.c.b16 %v559, %v558
    %v569 = vpack.c.b16 %v561, %v560
    %578 = vmatprep.subr.bf16.mxu0 0
    %579 = vmatpush1.bf16.msra.mxu0 %v569
    %580 = vmatprep.subr.bf16.mxu0 0
    %581 = vmatpush1.bf16.msra.mxu0 %v568
    %582 = vmatprep.subr.bf16.mxu0 0
    %583 = vmatpush1.bf16.msra.mxu0 %v567
    %584 = vmatprep.subr.bf16.mxu0 0
    %585 = vmatpush1.bf16.msra.mxu0 %v566
    %586 = vmatprep.subr.bf16.mxu0 0
    %587 = vmatpush1.bf16.msra.mxu0 %v565
    %588 = vmatprep.subr.bf16.mxu0 0
    %589 = vmatpush1.bf16.msra.mxu0 %v564
    %590 = vmatprep.subr.bf16.mxu0 0
    %591 = vmatpush1.bf16.msra.mxu0 %v563
    %592 = vmatprep.subr.bf16.mxu0 0
    %593 = vmatpush1.bf16.msra.mxu0 %v562
    %594 = vmatprep.subr.bf16.mxu0 0
    %595 = vmatpush2.bf16.msra.mxu0 0
    %596 = vmatprep.subr.bf16.mxu0 0
    %597 = vmatpush2.bf16.msra.mxu0 0
    %598 = vmatprep.subr.bf16.mxu0 0
    %599 = vmatpush2.bf16.msra.mxu0 0
    %600 = vmatprep.subr.bf16.mxu0 0
    %601 = vmatpush2.bf16.msra.mxu0 0
    %602 = vmatprep.subr.bf16.mxu0 0
    %603 = vmatpush2.bf16.msra.mxu0 0
    %604 = vmatprep.subr.bf16.mxu0 0
    %605 = vmatpush2.bf16.msra.mxu0 0
    %606 = vmatprep.subr.bf16.mxu0 0
    %607 = vmatpush2.bf16.msra.mxu0 0
    %608 = vmatprep.subr.bf16.mxu0 0
    %609 = vmatpush2.bf16.msra.mxu0 0
    %610 = vmatprep.mubr.bf16.mxu0 0
    %611 = vmatmul.mubr.bf16.gmra.mxu0 %v394
    %v612 = vpop.f32.mrf.mxu0
    %v613 = vadd.f32 %v528, %v612
    %v614 = vpop.f32.mrf.mxu0
    %v615 = vpop.f32.mrf.mxu0
    %v616 = vadd.f32 %v528, %v615
    %v617 = vpop.f32.mrf.mxu0
    %618 = vdwg.mxu0
    %619 = vst [vmem:[#allocation11] sm:$0xff] %v501
    %620 = vst [vmem:[#allocation11 + $0x8] sm:$0xff] %v504
    %621 = vst [vmem:[#allocation12] sm:$0xff] %v613
    %622 = vst [vmem:[#allocation12 + $0x8] sm:$0xff] %v616
    // Predicated region
    $region66: #{tpu_custom_call.1} parent=1 // pred_check
      _
    $region67: #{tpu_custom_call.1} parent=1 // pred_check_branch
      %624 = sbr.rel (0) target = $region69
    $region68: #{tpu_custom_call.1} parent=1 // pred_region
      %s626 = ssub.s32 256, 256
      %627 = vsyncadd [#allocation4], %s626
      %s628 = sshll.u32 [#allocation11], 4
      %s629 = int_to_ptr.vmem [resolvable:$true] %s628
      %634 = dma.vmem_to_hbm [thread:$0]  %s629, 256, %s11, [#allocation4], 128, 128, 8
    $region69: #{tpu_custom_call.1} parent=1 // pred_fallthru
      _
    // Predicated region
    $region70: #{tpu_custom_call.1} parent=1 // pred_check
      _
    $region71: #{tpu_custom_call.1} parent=1 // pred_check_branch
      %636 = sbr.rel (0) target = $region73
    $region72: #{tpu_custom_call.1} parent=1 // pred_region
      %s638 = ssub.s32 256, 256
      %639 = vsyncadd [#allocation13], %s638
      %s640 = sshll.u32 [#allocation12], 4
      %s641 = int_to_ptr.vmem [resolvable:$true] %s640
      %646 = dma.vmem_to_hbm [thread:$0]  %s641, 256, %s12, [#allocation13], 128, 128, 8
    $region73: #{tpu_custom_call.1} parent=1 // pred_fallthru
      _
    // Predicated region
    $region74: #{tpu_custom_call.1} parent=1 // pred_check
      _
    $region75: #{tpu_custom_call.1} parent=1 // pred_check_branch
      %648 = sbr.rel (0) target = $region77
    $region76: #{tpu_custom_call.1} parent=1 // pred_region
      %649 = dma.done [#allocation4], 256
    $region77: #{tpu_custom_call.1} parent=1 // pred_fallthru
      _
    // Predicated region
    $region78: #{tpu_custom_call.1} parent=1 // pred_check
      _
    $region79: #{tpu_custom_call.1} parent=1 // pred_check_branch
      %651 = sbr.rel (0) target = $region81
    $region80: #{tpu_custom_call.1} parent=1 // pred_region
      %652 = dma.done [#allocation13], 256
    $region81: #{tpu_custom_call.1} parent=1 // pred_fallthru
      _
    %653 = vsyncpa [#allocation3], 1
    %654 = vsyncpa [#allocation6], 1
    %655 = vsyncpa [#allocation9], 1
    %656 = vsyncpa [#allocation4], 1
    %657 = vsyncpa [#allocation13], 1

</llo_original>
